<compile_context>
chip_gen: v6e
topology: v6e:2x2x1
jax: 0.10.0
libtpu: 0.0.40
codegen_flags: <defaults>
</compile_context>

<pallas_src>
import jax
import jax.numpy as jnp
from jax.experimental import pallas as pl
from jax.experimental.pallas import tpu as pltpu


_LANES = 128


def _osn_pool_kernel(w_ref, b_ref, x_ref, out_ref, acc_ref):
    # w_ref  : SMEM (3, 3)           fused affine weight  W'[j, c]
    # b_ref  : SMEM (1, 3)           fused affine bias    b'[c]
    # x_ref  : VMEM (1, 3, R, 128)   spatial tile of one image (lane-dense)
    # out_ref: VMEM (1, 3, 128)      lane-wise channel sums for (image, split)
    # acc_ref: VMEM (3, 128)         running lane-wise channel sums (scratch)
    t = pl.program_id(2)

    @pl.when(t == 0)
    def _():
        acc_ref[...] = jnp.zeros_like(acc_ref)

    x = x_ref[...]                      # (1, 3, R, 128)
    x0 = x[0, 0]                        # (R, 128): full sublane/lane occupancy
    x1 = x[0, 1]
    x2 = x[0, 2]

    # TODO(synk): SCSEUnet(senet154) is an external pretrained network loaded
    # from disk in the original code; replaced by a 1x1 conv surrogate whose
    # normalize/denorm wrapping is folded into (w_ref, b_ref) on the host.
    for c in range(3):
        v = (w_ref[0, c] * x0 + w_ref[1, c] * x1 + w_ref[2, c] * x2
             + b_ref[0, c])
        v = jnp.clip(v, 0.0, 1.0)
        # Sublane-only reduce (XLU); the cross-lane reduce happens on the host.
        acc_ref[c:c + 1, :] += jnp.sum(v, axis=0, keepdims=True)

    @pl.when(t == pl.num_programs(2) - 1)
    def _():
        out_ref[0] = acc_ref[...]


def _round_up(a, b):
    return ((a + b - 1) // b) * b


def osn_model_forward(x_nchw, params, *, max_tile_rows=2048, spatial_splits=2):
    """x_nchw: (N, 3, H, W) float32. Returns logits (N, num_classes)."""
    n, c, h, w = x_nchw.shape
    assert c == 3, "OSN_Net normalization assumes 3 channels"
    hw = h * w

    mean = params["mean"].reshape(3).astype(jnp.float32)
    std = params["std"].reshape(3).astype(jnp.float32)
    wu = params["w_unet"].astype(jnp.float32)       # (3, 3), right-mult conv
    bu = params["b_unet"].reshape(3).astype(jnp.float32)
    wc = params["w_cls"].astype(jnp.float32)        # (3, K)
    bc = params["b_cls"].astype(jnp.float32)        # (1, K)

    # Fold normalize -> 1x1 conv -> denorm into a single affine:
    #   y_c = clip(sum_j x_j * W'[j, c] + b'[c], 0, 1)
    w_eff = (wu * std[None, :] / std[:, None]).astype(jnp.float32)      # (3, 3)
    b_eff = (bu * std + mean - (mean / std) @ (wu * std[None, :]))
    b_eff = b_eff.astype(jnp.float32).reshape(1, 3)

    # ---- lane-dense spatial layout + cdiv tiling with host-side zero pad ----
    rows = pl.cdiv(hw, _LANES)
    r_tile = max(8, min(max_tile_rows,
                        _round_up(pl.cdiv(rows, spatial_splits), 8)))
    tiles_per_split = pl.cdiv(rows, spatial_splits * r_tile)
    rows_pad = spatial_splits * tiles_per_split * r_tile
    hw_pad = rows_pad * _LANES

    # NCHW -> (N, 3, H*W): pure reshape (no transpose), then pad + 2D-ify.
    x = x_nchw.astype(jnp.float32).reshape(n, 3, hw)
    if hw_pad != hw:
        x = jnp.pad(x, ((0, 0), (0, 0), (0, hw_pad - hw)))
    x = x.reshape(n, 3, rows_pad, _LANES)

    grid = (n, spatial_splits, tiles_per_split)

    def x_index_map(b, s, t):
        return (b, 0, s * tiles_per_split + t, 0)

    def out_index_map(b, s, t):
        return (b * spatial_splits + s, 0, 0)

    part = pl.pallas_call(
        _osn_pool_kernel,
        out_shape=jax.ShapeDtypeStruct((n * spatial_splits, 3, _LANES),
                                       jnp.float32),
        grid=grid,
        in_specs=[
            pl.BlockSpec(memory_space=pltpu.MemorySpace.SMEM),     # w_eff
            pl.BlockSpec(memory_space=pltpu.MemorySpace.SMEM),     # b_eff
            pl.BlockSpec((1, 3, r_tile, _LANES), x_index_map),     # x
        ],
        out_specs=pl.BlockSpec((1, 3, _LANES), out_index_map),
        scratch_shapes=[pltpu.VMEM((3, _LANES), jnp.float32)],
        compiler_params=pltpu.CompilerParams(
            dimension_semantics=("parallel", "parallel", "arbitrary"),
            vmem_limit_bytes=32 * 1024 * 1024),
    )(w_eff, b_eff, x)

    # ---- host-side epilogue (tiny): combine splits/lanes, remove pad, head --
    sums = part.reshape(n, spatial_splits, 3, _LANES).sum(axis=(1, 3))  # (n, 3)
    pad_px = hw_pad - hw
    if pad_px:
        # Padded pixels are zeros; their post-affine value is clip(b', 0, 1).
        sums = sums - pad_px * jnp.clip(b_eff.reshape(3), 0.0, 1.0)[None, :]
    pooled = sums / hw                                                  # (n, 3)

    # TODO(synk): target_model is an externally supplied classifier; replaced
    # by global-average-pool + linear head, executed in plain XLA (~60 flops).
    return pooled @ wc + bc


def reference_forward(x_nchw, params):
    """Pure-JAX reference matching the original (unfused) math."""
    n, c, h, w = x_nchw.shape
    x_flat = jnp.transpose(x_nchw, (0, 2, 3, 1)).reshape(n * h * w, c)
    s = (x_flat - params["mean"]) / params["std"]
    u = s @ params["w_unet"] + params["b_unet"]
    y = jnp.clip(u * params["std"] + params["mean"], 0.0, 1.0)
    pooled = y.reshape(n, h * w, c).mean(axis=1)
    return pooled @ params["w_cls"] + params["b_cls"]


def make_params(key, num_classes=10):
    k1, k2, k3, k4 = jax.random.split(key, 4)
    return {
        "mean": jnp.full((1, 3), 0.5, dtype=jnp.float32),
        "std": jnp.full((1, 3), 0.5, dtype=jnp.float32),
        "w_unet": jax.random.normal(k1, (3, 3), dtype=jnp.float32) * 0.5,
        "b_unet": jax.random.normal(k2, (1, 3), dtype=jnp.float32) * 0.1,
        "w_cls": jax.random.normal(k3, (3, num_classes), dtype=jnp.float32) * 0.5,
        "b_cls": jax.random.normal(k4, (1, num_classes), dtype=jnp.float32) * 0.1,
    }


if __name__ == "__main__":
    key = jax.random.PRNGKey(0)
    k_x, k_p = jax.random.split(key)

    # Small NCHW input: batch=2, channels=3 (required by the module), 16x16.
    x = jax.random.uniform(k_x, (2, 3, 16, 16), dtype=jnp.float32)
    params = make_params(k_p)

    out = jax.block_until_ready(osn_model_forward(x, params))
    ref = reference_forward(x, params)

    assert out.shape == ref.shape == (2, 10)
    assert jnp.allclose(out, ref, atol=1e-4, rtol=1e-4), "mismatch vs reference"

    print("KERNEL_OK")
</pallas_src>

<mosaic_0001>
module attributes {stable_mosaic.version = 11 : i64} {
  func.func @_osn_pool_kernel(%arg0: i32, %arg1: i32, %arg2: i32, %arg3: memref<3x3xf32, #tpu.memory_space<smem>>, %arg4: memref<1x3xf32, #tpu.memory_space<smem>>, %arg5: memref<1x3x8x128xf32, #tpu.memory_space<vmem>>, %arg6: memref<1x3x128xf32, #tpu.memory_space<vmem>>, %arg7: memref<3x128xf32, #tpu.memory_space<vmem>>) attributes {dimension_semantics = [#tpu.dimension_semantics<parallel>, #tpu.dimension_semantics<parallel>, #tpu.dimension_semantics<arbitrary>], iteration_bounds = array<i64: 2, 2, 1>, scalar_prefetch = 0 : i64, scratch_operands = 1 : i64, tpu.core_type = #tpu.core_type<tc>, window_params = [{transform_indices = @transform_0, window_bounds = array<i64: 3, 3>}, {transform_indices = @transform_1, window_bounds = array<i64: 1, 3>}, {transform_indices = @transform_2, window_bounds = array<i64: 1, 3, 8, 128>}, {transform_indices = @transform_3, window_bounds = array<i64: 1, 3, 128>}]} {
    %c0_i32 = arith.constant 0 : i32
    %0 = arith.cmpi eq, %arg2, %c0_i32 : i32
    %1 = arith.extui %0 : i1 to i32
    %c0_i32_0 = arith.constant 0 : i32
    %2 = arith.cmpi ne, %1, %c0_i32_0 : i32
    scf.if %2 {
      %cst_48 = arith.constant 0.000000e+00 : f32
      %82 = vector.broadcast %cst_48 : f32 to vector<3x128xf32>
      %c0_49 = arith.constant 0 : index
      %c0_50 = arith.constant 0 : index
      %83 = vector.load %arg7[%c0_49, %c0_50] : memref<3x128xf32, #tpu.memory_space<vmem>>, vector<3x128xf32>
      tpu.vector_store %arg7[%c0_49, %c0_50], %82 {strides = array<i32>} : memref<3x128xf32, #tpu.memory_space<vmem>>, vector<3x128xf32>,
    } else {
    }
    %c0 = arith.constant 0 : index
    %c0_1 = arith.constant 0 : index
    %c0_2 = arith.constant 0 : index
    %c0_3 = arith.constant 0 : index
    %3 = vector.load %arg5[%c0, %c0_1, %c0_2, %c0_3] : memref<1x3x8x128xf32, #tpu.memory_space<vmem>>, vector<1x3x8x128xf32>
    %4 = vector.extract_strided_slice %3 {offsets = [0, 0, 0, 0], sizes = [1, 1, 8, 128], strides = [1, 1, 1, 1]} : vector<1x3x8x128xf32> to vector<1x1x8x128xf32>
    %5 = vector.shape_cast %4 : vector<1x1x8x128xf32> to vector<8x128xf32>
    %6 = vector.extract_strided_slice %3 {offsets = [0, 1, 0, 0], sizes = [1, 1, 8, 128], strides = [1, 1, 1, 1]} : vector<1x3x8x128xf32> to vector<1x1x8x128xf32>
    %7 = vector.shape_cast %6 : vector<1x1x8x128xf32> to vector<8x128xf32>
    %8 = vector.extract_strided_slice %3 {offsets = [0, 2, 0, 0], sizes = [1, 1, 8, 128], strides = [1, 1, 1, 1]} : vector<1x3x8x128xf32> to vector<1x1x8x128xf32>
    %9 = vector.shape_cast %8 : vector<1x1x8x128xf32> to vector<8x128xf32>
    %c0_4 = arith.constant 0 : index
    %c0_5 = arith.constant 0 : index
    %10 = memref.load %arg3[%c0_4, %c0_5] : memref<3x3xf32, #tpu.memory_space<smem>>
    %11 = vector.broadcast %10 : f32 to vector<8x128xf32>
    %12 = arith.mulf %11, %5 : vector<8x128xf32>
    %c1 = arith.constant 1 : index
    %c0_6 = arith.constant 0 : index
    %13 = memref.load %arg3[%c1, %c0_6] : memref<3x3xf32, #tpu.memory_space<smem>>
    %14 = vector.broadcast %13 : f32 to vector<8x128xf32>
    %15 = arith.mulf %14, %7 : vector<8x128xf32>
    %16 = arith.addf %12, %15 : vector<8x128xf32>
    %c2 = arith.constant 2 : index
    %c0_7 = arith.constant 0 : index
    %17 = memref.load %arg3[%c2, %c0_7] : memref<3x3xf32, #tpu.memory_space<smem>>
    %18 = vector.broadcast %17 : f32 to vector<8x128xf32>
    %19 = arith.mulf %18, %9 : vector<8x128xf32>
    %20 = arith.addf %16, %19 : vector<8x128xf32>
    %c0_8 = arith.constant 0 : index
    %c0_9 = arith.constant 0 : index
    %21 = memref.load %arg4[%c0_8, %c0_9] : memref<1x3xf32, #tpu.memory_space<smem>>
    %22 = vector.broadcast %21 : f32 to vector<8x128xf32>
    %23 = arith.addf %20, %22 : vector<8x128xf32>
    %cst = arith.constant 0.000000e+00 : f32
    %cst_10 = arith.constant 1.000000e+00 : f32
    %24 = vector.broadcast %cst : f32 to vector<8x128xf32>
    %25 = arith.maximumf %24, %23 : vector<8x128xf32>
    %26 = vector.broadcast %cst_10 : f32 to vector<8x128xf32>
    %27 = arith.minimumf %26, %25 : vector<8x128xf32>
    %c0_11 = arith.constant 0 : index
    %c0_12 = arith.constant 0 : index
    %28 = vector.load %arg7[%c0_11, %c0_12] : memref<3x128xf32, #tpu.memory_space<vmem>>, vector<1x128xf32>
    %cst_13 = arith.constant dense<0.000000e+00> : vector<128xf32>
    %29 = vector.multi_reduction <add>, %27, %cst_13 [0] : vector<8x128xf32> to vector<128xf32>
    %30 = vector.shape_cast %29 : vector<128xf32> to vector<1x128xf32>
    %31 = arith.addf %28, %30 : vector<1x128xf32>
    %c0_14 = arith.constant 0 : index
    %c0_15 = arith.constant 0 : index
    %32 = vector.load %arg7[%c0_14, %c0_15] : memref<3x128xf32, #tpu.memory_space<vmem>>, vector<1x128xf32>
    tpu.vector_store %arg7[%c0_14, %c0_15], %31 {strides = array<i32>} : memref<3x128xf32, #tpu.memory_space<vmem>>, vector<1x128xf32>,
    %c0_16 = arith.constant 0 : index
    %c1_17 = arith.constant 1 : index
    %33 = memref.load %arg3[%c0_16, %c1_17] : memref<3x3xf32, #tpu.memory_space<smem>>
    %34 = vector.broadcast %33 : f32 to vector<8x128xf32>
    %35 = arith.mulf %34, %5 : vector<8x128xf32>
    %c1_18 = arith.constant 1 : index
    %c1_19 = arith.constant 1 : index
    %36 = memref.load %arg3[%c1_18, %c1_19] : memref<3x3xf32, #tpu.memory_space<smem>>
    %37 = vector.broadcast %36 : f32 to vector<8x128xf32>
    %38 = arith.mulf %37, %7 : vector<8x128xf32>
    %39 = arith.addf %35, %38 : vector<8x128xf32>
    %c2_20 = arith.constant 2 : index
    %c1_21 = arith.constant 1 : index
    %40 = memref.load %arg3[%c2_20, %c1_21] : memref<3x3xf32, #tpu.memory_space<smem>>
    %41 = vector.broadcast %40 : f32 to vector<8x128xf32>
    %42 = arith.mulf %41, %9 : vector<8x128xf32>
    %43 = arith.addf %39, %42 : vector<8x128xf32>
    %c0_22 = arith.constant 0 : index
    %c1_23 = arith.constant 1 : index
    %44 = memref.load %arg4[%c0_22, %c1_23] : memref<1x3xf32, #tpu.memory_space<smem>>
    %45 = vector.broadcast %44 : f32 to vector<8x128xf32>
    %46 = arith.addf %43, %45 : vector<8x128xf32>
    %cst_24 = arith.constant 0.000000e+00 : f32
    %cst_25 = arith.constant 1.000000e+00 : f32
    %47 = vector.broadcast %cst_24 : f32 to vector<8x128xf32>
    %48 = arith.maximumf %47, %46 : vector<8x128xf32>
    %49 = vector.broadcast %cst_25 : f32 to vector<8x128xf32>
    %50 = arith.minimumf %49, %48 : vector<8x128xf32>
    %c1_26 = arith.constant 1 : index
    %c0_27 = arith.constant 0 : index
    %51 = vector.load %arg7[%c1_26, %c0_27] : memref<3x128xf32, #tpu.memory_space<vmem>>, vector<1x128xf32>
    %cst_28 = arith.constant dense<0.000000e+00> : vector<128xf32>
    %52 = vector.multi_reduction <add>, %50, %cst_28 [0] : vector<8x128xf32> to vector<128xf32>
    %53 = vector.shape_cast %52 : vector<128xf32> to vector<1x128xf32>
    %54 = arith.addf %51, %53 : vector<1x128xf32>
    %c1_29 = arith.constant 1 : index
    %c0_30 = arith.constant 0 : index
    %55 = vector.load %arg7[%c1_29, %c0_30] : memref<3x128xf32, #tpu.memory_space<vmem>>, vector<1x128xf32>
    tpu.vector_store %arg7[%c1_29, %c0_30], %54 {strides = array<i32>} : memref<3x128xf32, #tpu.memory_space<vmem>>, vector<1x128xf32>,
    %c0_31 = arith.constant 0 : index
    %c2_32 = arith.constant 2 : index
    %56 = memref.load %arg3[%c0_31, %c2_32] : memref<3x3xf32, #tpu.memory_space<smem>>
    %57 = vector.broadcast %56 : f32 to vector<8x128xf32>
    %58 = arith.mulf %57, %5 : vector<8x128xf32>
    %c1_33 = arith.constant 1 : index
    %c2_34 = arith.constant 2 : index
    %59 = memref.load %arg3[%c1_33, %c2_34] : memref<3x3xf32, #tpu.memory_space<smem>>
    %60 = vector.broadcast %59 : f32 to vector<8x128xf32>
    %61 = arith.mulf %60, %7 : vector<8x128xf32>
    %62 = arith.addf %58, %61 : vector<8x128xf32>
    %c2_35 = arith.constant 2 : index
    %c2_36 = arith.constant 2 : index
    %63 = memref.load %arg3[%c2_35, %c2_36] : memref<3x3xf32, #tpu.memory_space<smem>>
    %64 = vector.broadcast %63 : f32 to vector<8x128xf32>
    %65 = arith.mulf %64, %9 : vector<8x128xf32>
    %66 = arith.addf %62, %65 : vector<8x128xf32>
    %c0_37 = arith.constant 0 : index
    %c2_38 = arith.constant 2 : index
    %67 = memref.load %arg4[%c0_37, %c2_38] : memref<1x3xf32, #tpu.memory_space<smem>>
    %68 = vector.broadcast %67 : f32 to vector<8x128xf32>
    %69 = arith.addf %66, %68 : vector<8x128xf32>
    %cst_39 = arith.constant 0.000000e+00 : f32
    %cst_40 = arith.constant 1.000000e+00 : f32
    %70 = vector.broadcast %cst_39 : f32 to vector<8x128xf32>
    %71 = arith.maximumf %70, %69 : vector<8x128xf32>
    %72 = vector.broadcast %cst_40 : f32 to vector<8x128xf32>
    %73 = arith.minimumf %72, %71 : vector<8x128xf32>
    %c2_41 = arith.constant 2 : index
    %c0_42 = arith.constant 0 : index
    %74 = vector.load %arg7[%c2_41, %c0_42] : memref<3x128xf32, #tpu.memory_space<vmem>>, vector<1x128xf32>
    %cst_43 = arith.constant dense<0.000000e+00> : vector<128xf32>
    %75 = vector.multi_reduction <add>, %73, %cst_43 [0] : vector<8x128xf32> to vector<128xf32>
    %76 = vector.shape_cast %75 : vector<128xf32> to vector<1x128xf32>
    %77 = arith.addf %74, %76 : vector<1x128xf32>
    %c2_44 = arith.constant 2 : index
    %c0_45 = arith.constant 0 : index
    %78 = vector.load %arg7[%c2_44, %c0_45] : memref<3x128xf32, #tpu.memory_space<vmem>>, vector<1x128xf32>
    tpu.vector_store %arg7[%c2_44, %c0_45], %77 {strides = array<i32>} : memref<3x128xf32, #tpu.memory_space<vmem>>, vector<1x128xf32>,
    %c0_i32_46 = arith.constant 0 : i32
    %79 = arith.cmpi eq, %arg2, %c0_i32_46 : i32
    %80 = arith.extui %79 : i1 to i32
    %c0_i32_47 = arith.constant 0 : i32
    %81 = arith.cmpi ne, %80, %c0_i32_47 : i32
    scf.if %81 {
      %c0_48 = arith.constant 0 : index
      %c0_49 = arith.constant 0 : index
      %82 = vector.load %arg7[%c0_48, %c0_49] : memref<3x128xf32, #tpu.memory_space<vmem>>, vector<3x128xf32>
      %c0_50 = arith.constant 0 : index
      %c0_51 = arith.constant 0 : index
      %c0_52 = arith.constant 0 : index
      %83 = vector.load %arg6[%c0_50, %c0_51, %c0_52] : memref<1x3x128xf32, #tpu.memory_space<vmem>>, vector<1x3x128xf32>
      %84 = vector.shape_cast %83 : vector<1x3x128xf32> to vector<3x128xf32>
      %85 = vector.shape_cast %82 : vector<3x128xf32> to vector<1x3x128xf32>
      tpu.vector_store %arg6[%c0_50, %c0_51, %c0_52], %85 {strides = array<i32>} : memref<1x3x128xf32, #tpu.memory_space<vmem>>, vector<1x3x128xf32>,
    } else {
    }
    return
  }
  func.func @transform_0(%arg0: i32, %arg1: i32, %arg2: i32) -> (i32, i32) {
    %c0_i32 = arith.constant 0 : i32
    %c0_i32_0 = arith.constant 0 : i32
    %c0_i32_1 = arith.constant 0 : i32
    return %c0_i32, %c0_i32_0 : i32, i32
  }
  func.func @transform_1(%arg0: i32, %arg1: i32, %arg2: i32) -> (i32, i32) {
    %c0_i32 = arith.constant 0 : i32
    %c0_i32_0 = arith.constant 0 : i32
    %c0_i32_1 = arith.constant 0 : i32
    return %c0_i32, %c0_i32_0 : i32, i32
  }
  func.func @transform_2(%arg0: i32, %arg1: i32, %arg2: i32) -> (i32, i32, i32, i32) {
    %c1_i32 = arith.constant 1 : i32
    %0 = arith.muli %arg1, %c1_i32 : i32
    %1 = arith.addi %0, %arg2 : i32
    %c0_i32 = arith.constant 0 : i32
    %c0_i32_0 = arith.constant 0 : i32
    %c0_i32_1 = arith.constant 0 : i32
    return %arg0, %c0_i32, %1, %c0_i32_0 : i32, i32, i32, i32
  }
  func.func @transform_3(%arg0: i32, %arg1: i32, %arg2: i32) -> (i32, i32, i32) {
    %c2_i32 = arith.constant 2 : i32
    %0 = arith.muli %arg0, %c2_i32 : i32
    %1 = arith.addi %0, %arg1 : i32
    %c0_i32 = arith.constant 0 : i32
    %c0_i32_0 = arith.constant 0 : i32
    %c0_i32_1 = arith.constant 0 : i32
    return %1, %c0_i32, %c0_i32_0 : i32, i32, i32
  }
}

</mosaic_0001>

<llo_original>
// kernel: tpu_custom_call.1
$region0: #{tpu_custom_call.1}
  #allocation0 [shape = 'u32[]', space=smem, size = 0x4, offset = 0x4, fixed_abs, tag = 'smem constant byte address 0x4 - core index']
  #allocation1 [shape = 'u32[144,128]{1,0:T(1,128)}', space=vmem, size = 0x12000, scoped, tag = 'internal scratch']
  #allocation2 [shape = 'f32[3,128]{1,0:T(4,128)}', space=vmem, size = 0x800, scoped, tag = 'scratch operand']
  %s0 = inlined_call_operand.hbm [shape: f32[3,3], index: 0, kind: input, shape index: {}]
  %s1 = inlined_call_operand.vmem [shape: f32[1,3], index: 1, kind: input, shape index: {}]
  %s2 = inlined_call_operand.hbm [shape: f32[2,3,16,128], index: 2, kind: input, shape index: {}]
  %s3 = inlined_call_operand.vmem [shape: f32[4,3,128], index: 3, kind: output, shape index: {}]
  %s4 = sld [smem:[#allocation0]]
  $region65: #{tpu_custom_call.1} parent=0
    _
  %s6 = ssub.s32 1, %s4
  %s7 = scalar_select 0, %s6, %s4
  $region1: #{tpu_custom_call.1} parent=0
    #allocation3 [shape = 'u8[2048]{0}', space=smem, size = 0x800, scoped, tag = 'input window, operand 0, single buffered']
    #allocation4 [shape = 's32[2]{0}', space=sflag, size = 0x8, scoped, tag = 'scoped memory for tpu_custom_call.1']
    #allocation5 [shape = 's32[2]{0}', space=sflag, size = 0x8, scoped, tag = 'scoped memory for tpu_custom_call.1']
    #allocation6 [shape = 's32[2]{0}', space=sflag, size = 0x8, scoped, tag = 'scoped memory for tpu_custom_call.1']
    #allocation7 [shape = 'u8[512]{0}', space=smem, size = 0x200, scoped, tag = 'input window, operand 1, single buffered']
    #allocation8 [shape = 'u8[24576]{0}', space=vmem, size = 0x6000, scoped, tag = 'input window, operand 2']
    %8 = vsyncpa [#allocation5], 0
    %9 = vsyncpa [#allocation6], 0
    %10 = vsyncpa [#allocation4], 0
    %s11 = scalar_lea.sflag [#allocation4], 1
    %12 = vsyncpa %s11, 0
    loop: start=0, step=1, limit=6
    $region2: #{tpu_custom_call.1} parent=1 // loop_pre_header
      _
    $region3: #{tpu_custom_call.1} parent=1 // loop_header
      %s14 = sphi 0, %s18
      %p15 = scmp.ge.s32.totalorder %s14, 6
      %s21 = sphi 0, %s40
      %s22 = sphi 0, %s36
      %s23 = sphi 0, %s32
      %s24 = sphi 0, %s21
      %s25 = sphi 0, %s22
      %s26 = sphi 0, %s23
      %s27 = sphi 0, %s24
      %s28 = sphi 0, %s25
      %s29 = sphi 0, %s26
      %s41 = sphi 0, %s41
      %s43 = sphi 0, %s41
      %s44 = sphi 0, %s43
      %s58 = sphi 0, %s44
      %s62 = sphi 0, %s62
      %s64 = sphi 0, %s62
      %s65 = sphi 0, %s64
      %s79 = sphi 0, %s65
      %s89 = sphi 0, %s91
      %s92 = sphi 0, %s89
      %s93 = sphi 0, %s92
      %s109 = sphi 0, %s93
      %s119 = sphi 0, %s121
      %s122 = sphi 0, %s119
      %s123 = sphi 0, %s122
      %s139 = sphi 0, %s123
    $region4: #{tpu_custom_call.1} parent=1 // loop_header_branch
      %17 = sbr.rel (%p15) target = $region8
    $region5: #{tpu_custom_call.1} parent=1 // loop_body
      %s19 = ssub.s32 %s14, 1
      %s20 = ssub.s32 %s14, 2
      %s30 = sadd.s32 1, %s23
      %p31 = scmp.ge.s32.totalorder %s30, 1
      %s32 = scalar_select %p31, 0, %s30
      %s33 = sadd.s32 1, %s22
      %s34 = scalar_select %p31, %s33, %s22
      %p35 = scmp.ge.s32.totalorder %s34, 2
      %s36 = scalar_select %p35, 0, %s34
      %s37 = sadd.s32 1, %s21
      %s38 = scalar_select %p35, %s37, %s21
      %p39 = scmp.ge.s32.totalorder %s38, 2
      %s40 = scalar_select %p39, 0, %s38
      %s42 = sadd.s32 %s41, 1
      %p45 = scmp.eq.s32.totalorder %s14, 3
      %p46 = scmp.ne.s32.totalorder %s41, %s43
      %p47 = scmp.eq.s32.totalorder %s14, 0
      %p48 = por %p46, %p47
      %p49 = scmp.ne.s32.totalorder %s41, %s43
      %p50 = scmp.eq.s32.totalorder %s19, 3
      %p51 = por %p49, %p50
      %p52 = scmp.ne.s32.totalorder %s43, %s44
      %p53 = scmp.eq.s32.totalorder %s19, 0
      %p54 = por %p52, %p53
      %p55 = scmp.ne.s32.totalorder %s43, %s44
      %p56 = scmp.eq.s32.totalorder %s20, 3
      %p57 = por %p55, %p56
      %p59 = scmp.ne.s32.totalorder %s44, %s58
      %p60 = scmp.eq.s32.totalorder %s20, 0
      %p61 = por %p59, %p60
      %s63 = sadd.s32 %s62, 1
      %p66 = scmp.eq.s32.totalorder %s14, 3
      %p67 = scmp.ne.s32.totalorder %s62, %s64
      %p68 = scmp.eq.s32.totalorder %s14, 0
      %p69 = por %p67, %p68
      %p70 = scmp.ne.s32.totalorder %s62, %s64
      %p71 = scmp.eq.s32.totalorder %s19, 3
      %p72 = por %p70, %p71
      %p73 = scmp.ne.s32.totalorder %s64, %s65
      %p74 = scmp.eq.s32.totalorder %s19, 0
      %p75 = por %p73, %p74
      %p76 = scmp.ne.s32.totalorder %s64, %s65
      %p77 = scmp.eq.s32.totalorder %s20, 3
      %p78 = por %p76, %p77
      %p80 = scmp.ne.s32.totalorder %s65, %s79
      %p81 = scmp.eq.s32.totalorder %s20, 0
      %p82 = por %p80, %p81
      %s83 = sadd.s32 %s22, %s23
      %s84 = sadd.s32 %s36, %s32
      %s85 = ssub.s32 %s21, %s40
      %s86 = ssub.s32 %s83, %s84
      %s87 = sor.u32 %s85, %s86
      %p88 = scmp.eq.s32.totalorder %s87, 0
      %s90 = sadd.s32 %s89, 1
      %s91 = scalar_select %p88, %s89, %s90
      %p94 = pneg %p88
      %p95 = scmp.eq.s32.totalorder %s14, 3
      %p96 = por %p94, %p95
      %p97 = scmp.ne.s32.totalorder %s89, %s92
      %p98 = scmp.eq.s32.totalorder %s14, 0
      %p99 = por %p97, %p98
      %p100 = scmp.ne.s32.totalorder %s89, %s92
      %p101 = scmp.eq.s32.totalorder %s19, 3
      %p102 = por %p100, %p101
      %p103 = scmp.ne.s32.totalorder %s92, %s93
      %p104 = scmp.eq.s32.totalorder %s19, 0
      %p105 = por %p103, %p104
      %p106 = scmp.ne.s32.totalorder %s92, %s93
      %p107 = scmp.eq.s32.totalorder %s20, 3
      %p108 = por %p106, %p107
      %p110 = scmp.ne.s32.totalorder %s93, %s109
      %p111 = scmp.eq.s32.totalorder %s20, 0
      %p112 = por %p110, %p111
      %s113 = smul.u32 %s21, 2
      %s114 = sadd.s32 %s113, %s22
      %s115 = smul.u32 %s40, 2
      %s116 = sadd.s32 %s115, %s36
      %s117 = ssub.s32 %s114, %s116
      %p118 = scmp.eq.s32.totalorder %s117, 0
      %s120 = sadd.s32 %s119, 1
      %s121 = scalar_select %p118, %s119, %s120
      %p124 = pneg %p118
      %p125 = scmp.eq.s32.totalorder %s14, 3
      %p126 = por %p124, %p125
      %p127 = scmp.ne.s32.totalorder %s119, %s122
      %p128 = scmp.eq.s32.totalorder %s14, 0
      %p129 = por %p127, %p128
      %p130 = scmp.ne.s32.totalorder %s119, %s122
      %p131 = scmp.eq.s32.totalorder %s19, 3
      %p132 = por %p130, %p131
      %p133 = scmp.ne.s32.totalorder %s122, %s123
      %p134 = scmp.eq.s32.totalorder %s19, 0
      %p135 = por %p133, %p134
      %p136 = scmp.ne.s32.totalorder %s122, %s123
      %p137 = scmp.eq.s32.totalorder %s20, 3
      %p138 = por %p136, %p137
      %p140 = scmp.ne.s32.totalorder %s123, %s139
      %p141 = scmp.eq.s32.totalorder %s20, 0
      %p142 = por %p140, %p141
      %p143 = scmp.le.s32.totalorder 1, %s14
      %p144 = scmp.lt.s32.totalorder %s14, 5
      %p145 = pnand %p143, %p144
      %p146 = pneg %p145
      // Predicated region
      $region9: #{tpu_custom_call.1} parent=5 // pred_check
        _
      $region10: #{tpu_custom_call.1} parent=5 // pred_check_branch
        %148 = sbr.rel (%p145) target = $region12
      $region11: #{tpu_custom_call.1} parent=5 // pred_region
        %s149 = ssub.s32 %s14, 1
        // Predicated region
        $region13: #{tpu_custom_call.1} parent=11 // pred_check
          %p150 = pneg %p54
        $region14: #{tpu_custom_call.1} parent=11 // pred_check_branch
          %152 = sbr.rel (%p150) target = $region16
        $region15: #{tpu_custom_call.1} parent=11 // pred_region
          %s154 = ssub.s32 64, 64
          %155 = vsyncadd [#allocation5], %s154
          %158 = dma.hbm_to_smem %s0, 64, [#allocation3], [#allocation5]
        $region16: #{tpu_custom_call.1} parent=11 // pred_fallthru
          _
        // Predicated region
        $region17: #{tpu_custom_call.1} parent=11 // pred_check
          %p159 = pneg %p75
        $region18: #{tpu_custom_call.1} parent=11 // pred_check_branch
          %161 = sbr.rel (%p159) target = $region20
        $region19: #{tpu_custom_call.1} parent=11 // pred_region
          %s163 = ssub.s32 16, 16
          %164 = vsyncadd [#allocation6], %s163
          %s166 = sshll.u32 %s1, 4
          %s167 = int_to_ptr.vmem [resolvable:$true] %s166
          %169 = dma.vmem_to_smem %s167, 16, [#allocation7], [#allocation6]
        $region20: #{tpu_custom_call.1} parent=11 // pred_fallthru
          _
      $region12: #{tpu_custom_call.1} parent=5 // pred_fallthru
        _
      %p170 = scmp.lt.s32.totalorder %s14, 4
      // Predicated region
      $region21: #{tpu_custom_call.1} parent=5 // pred_check
        %p171 = pneg %p170
      $region22: #{tpu_custom_call.1} parent=5 // pred_check_branch
        %173 = sbr.rel (%p171) target = $region24
      $region23: #{tpu_custom_call.1} parent=5 // pred_region
        // Predicated region
        $region25: #{tpu_custom_call.1} parent=23 // pred_check
          %p174 = pneg %p99
        $region26: #{tpu_custom_call.1} parent=23 // pred_check_branch
          %176 = sbr.rel (%p174) target = $region28
        $region27: #{tpu_custom_call.1} parent=23 // pred_region
          %s177 = sand.u32 %s89, 1
          %s178 = scalar_lea.sflag [#allocation4], %s177
          %s179 = sand.u32 %s89, 1
          %s180 = smul.addr %s179, 24
          %s181 = scalar_lea.vmem [#allocation8], %s180
          %s182 = sadd.s32 %s22, %s23
          %s184 = ssub.s32 384, 384
          %185 = vsyncadd %s178, %s184
          %s186 = smul.addr %s21, 6
          %s187 = sadd.s32 %s182, %s186
          %s188 = smul.addr %s187, 128
          %s189 = scalar_lea.hbm %s2, %s188
          %s190 = sshll.u32 %s181, 4
          %s191 = int_to_ptr.vmem [resolvable:$true] %s190
          %196 = dma.hbm_to_vmem [thread:$0]  %s189, 384, %s191, %s178, 256, 128, 8
        $region28: #{tpu_custom_call.1} parent=23 // pred_fallthru
          _
      $region24: #{tpu_custom_call.1} parent=5 // pred_fallthru
        _
      %p197 = scmp.le.s32.totalorder 1, %s14
      %p198 = scmp.lt.s32.totalorder %s14, 5
      %p199 = pnand %p197, %p198
      %p200 = pneg %p199
      // Predicated region
      $region29: #{tpu_custom_call.1} parent=5 // pred_check
        _
      $region30: #{tpu_custom_call.1} parent=5 // pred_check_branch
        %202 = sbr.rel (%p199) target = $region32
      $region31: #{tpu_custom_call.1} parent=5 // pred_region
        %s203 = ssub.s32 %s14, 1
        // Predicated region
        $region33: #{tpu_custom_call.1} parent=31 // pred_check
          %p204 = pneg %p54
        $region34: #{tpu_custom_call.1} parent=31 // pred_check_branch
          %206 = sbr.rel (%p204) target = $region36
        $region35: #{tpu_custom_call.1} parent=31 // pred_region
          %207 = dma.done [#allocation5], 64
        $region36: #{tpu_custom_call.1} parent=31 // pred_fallthru
          _
        // Predicated region
        $region37: #{tpu_custom_call.1} parent=31 // pred_check
          %p208 = pneg %p75
        $region38: #{tpu_custom_call.1} parent=31 // pred_check_branch
          %210 = sbr.rel (%p208) target = $region40
        $region39: #{tpu_custom_call.1} parent=31 // pred_region
          %211 = dma.done [#allocation6], 16
        $region40: #{tpu_custom_call.1} parent=31 // pred_fallthru
          _
        %s212 = sand.u32 %s92, 1
        %s213 = scalar_lea.sflag [#allocation4], %s212
        %s214 = sand.u32 %s92, 1
        %s215 = smul.addr %s214, 24
        %s216 = scalar_lea.vmem [#allocation8], %s215
        // Predicated region
        $region41: #{tpu_custom_call.1} parent=31 // pred_check
          %p217 = pneg %p105
        $region42: #{tpu_custom_call.1} parent=31 // pred_check_branch
          %219 = sbr.rel (%p217) target = $region44
        $region43: #{tpu_custom_call.1} parent=31 // pred_region
          %220 = dma.done %s213, 384
        $region44: #{tpu_custom_call.1} parent=31 // pred_fallthru
          _
        %221 = sfence
        %p222 = pneg %p54
        %p223 = pneg %p51
        %p224 = pneg %p75
        %p225 = pneg %p72
        %s226 = sand.u32 %s92, 1
        %s227 = scalar_lea.sflag [#allocation4], %s226
        %s228 = sand.u32 %s92, 1
        %s229 = smul.addr %s228, 24
        %s230 = scalar_lea.vmem [#allocation8], %s229
        %p231 = pneg %p105
        %p232 = pneg %p102
        %p233 = pneg %p135
        %p234 = pneg %p132
        %s235 = smul.u32 %s24, 2
        %s236 = sadd.s32 %s235, %s25
        %p237 = scmp.lt.s32.totalorder %s236, 3
        %s238 = scalar_select %p237, %s236, 3
        %s239 = smul.addr %s238, 4
        %s240 = scalar_lea.vmem %s3, %s239
        %s241 = sadd.s32 %s25, %s26
        %s242 = smul.u32 %s24, 2
        %s243 = sadd.s32 %s242, %s25
        %p244 = scmp.lt.s32.totalorder %s243, 3
        %s245 = scalar_select %p244, %s243, 3
        %s246 = smul.addr %s245, 4
        %s247 = scalar_lea.vmem %s3, %s246
        %s248 = smul.u32 %s24, 2
        %s249 = sadd.s32 %s248, %s25
        %p250 = scmp.eq.s32.totalorder %s26, 0
        // Predicated region
        $region45: #{tpu_custom_call.1} parent=31 // pred_check
          %p251 = pneg %p250
        $region46: #{tpu_custom_call.1} parent=31 // pred_check_branch
          %253 = sbr.rel (%p251) target = $region48
        $region47: #{tpu_custom_call.1} parent=31 // pred_region
          %254 = vst [vmem:[#allocation2] sm:$0x7] 0.0
        $region48: #{tpu_custom_call.1} parent=31 // pred_fallthru
          _
        %v255 = vld [vmem:[%s216] sm:$0xff]
        %v256 = vld [vmem:[%s216 + $0x8] sm:$0xff]
        %v257 = vld [vmem:[%s216 + $0x10] sm:$0xff]
        %s258 = sld [smem:[#allocation3]]
        %v259 = vstv %s258
        %v260 = vmul.f32 %v259, %v255
        %s261 = sld [smem:[#allocation3 + $0x80]]
        %v262 = vstv %s261
        %v263 = vmul.f32 %v262, %v256
        %v264 = vadd.f32 %v260, %v263
        %s265 = sld [smem:[#allocation3 + $0x100]]
        %v266 = vstv %s265
        %v267 = vmul.f32 %v266, %v257
        %v268 = vadd.f32 %v264, %v267
        %s269 = sld [smem:[#allocation7]]
        %v270 = vstv %s269
        %v271 = vadd.f32 %v268, %v270
        %v272 = vmax.f32 %v271, 0.0
        %v273 = vmin.f32 %v272, 1.0
        %v274 = vld [vmem:[#allocation2] sm:$0x1]
        %v275 = vrot.slane %v273, 4
        %v276 = vadd.f32 %v273, %v275
        %v277 = vrot.slane %v276, 2
        %v278 = vadd.f32 %v276, %v277
        %v279 = vrot.slane %v278, 1
        %v280 = vadd.f32 %v278, %v279
        %v281 = vadd.f32 %v274, %v280
        %282 = vst [vmem:[#allocation2] sm:$0x1] %v281
        %s283 = sld [smem:[#allocation3 + $0x1]]
        %v284 = vstv %s283
        %v285 = vmul.f32 %v284, %v255
        %s286 = sld [smem:[#allocation3 + $0x81]]
        %v287 = vstv %s286
        %v288 = vmul.f32 %v287, %v256
        %v289 = vadd.f32 %v285, %v288
        %s290 = sld [smem:[#allocation3 + $0x101]]
        %v291 = vstv %s290
        %v292 = vmul.f32 %v291, %v257
        %v293 = vadd.f32 %v289, %v292
        %s294 = sld [smem:[#allocation7 + $0x1]]
        %v295 = vstv %s294
        %v296 = vadd.f32 %v293, %v295
        %v297 = vmax.f32 %v296, 0.0
        %v298 = vmin.f32 %v297, 1.0
        %v299 = vld [vmem:[#allocation2 + $0x1] sm:$0x1]
        %v300 = vrot.slane %v298, 4
        %v301 = vadd.f32 %v298, %v300
        %v302 = vrot.slane %v301, 2
        %v303 = vadd.f32 %v301, %v302
        %v304 = vrot.slane %v303, 1
        %v305 = vadd.f32 %v303, %v304
        %v306 = vadd.f32 %v299, %v305
        %307 = vst [vmem:[#allocation2 + $0x1] sm:$0x1] %v306
        %s308 = sld [smem:[#allocation3 + $0x2]]
        %v309 = vstv %s308
        %v310 = vmul.f32 %v309, %v255
        %s311 = sld [smem:[#allocation3 + $0x82]]
        %v312 = vstv %s311
        %v313 = vmul.f32 %v312, %v256
        %v314 = vadd.f32 %v310, %v313
        %s315 = sld [smem:[#allocation3 + $0x102]]
        %v316 = vstv %s315
        %v317 = vmul.f32 %v316, %v257
        %v318 = vadd.f32 %v314, %v317
        %s319 = sld [smem:[#allocation7 + $0x2]]
        %v320 = vstv %s319
        %v321 = vadd.f32 %v318, %v320
        %v322 = vmax.f32 %v321, 0.0
        %v323 = vmin.f32 %v322, 1.0
        %v324 = vld [vmem:[#allocation2 + $0x2] sm:$0x1]
        %v325 = vrot.slane %v323, 4
        %v326 = vadd.f32 %v323, %v325
        %v327 = vrot.slane %v326, 2
        %v328 = vadd.f32 %v326, %v327
        %v329 = vrot.slane %v328, 1
        %v330 = vadd.f32 %v328, %v329
        %v331 = vadd.f32 %v324, %v330
        %332 = vst [vmem:[#allocation2 + $0x2] sm:$0x1] %v331
        // Predicated region
        $region49: #{tpu_custom_call.1} parent=31 // pred_check
          %p333 = pneg %p250
        $region50: #{tpu_custom_call.1} parent=31 // pred_check_branch
          %335 = sbr.rel (%p333) target = $region52
        $region51: #{tpu_custom_call.1} parent=31 // pred_region
          %v336 = vld [vmem:[#allocation2] sm:$0x7]
          %337 = vst [vmem:[%s247] sm:$0x7] %v336
        $region52: #{tpu_custom_call.1} parent=31 // pred_fallthru
          _
        %s338 = smul.u32 %s24, 2
        %s339 = sadd.s32 %s338, %s25
        %p340 = scmp.lt.s32.totalorder %s339, 3
        %s341 = scalar_select %p340, %s339, 3
        %s342 = smul.addr %s341, 4
        %s343 = scalar_lea.vmem %s3, %s342
        // Predicated region
        $region53: #{tpu_custom_call.1} parent=31 // pred_check
          %p344 = pneg %p132
        $region54: #{tpu_custom_call.1} parent=31 // pred_check_branch
          %346 = sbr.rel (%p344) target = $region56
        $region55: #{tpu_custom_call.1} parent=31 // pred_region
          %s347 = smul.u32 %s24, 2
          %s348 = sadd.s32 %s347, %s25
        $region56: #{tpu_custom_call.1} parent=31 // pred_fallthru
          _
      $region32: #{tpu_custom_call.1} parent=5 // pred_fallthru
        _
      %p349 = scmp.le.s32.totalorder 2, %s14
      // Predicated region
      $region57: #{tpu_custom_call.1} parent=5 // pred_check
        %p350 = pneg %p349
      $region58: #{tpu_custom_call.1} parent=5 // pred_check_branch
        %352 = sbr.rel (%p350) target = $region60
      $region59: #{tpu_custom_call.1} parent=5 // pred_region
        %s353 = ssub.s32 %s14, 2
        // Predicated region
        $region61: #{tpu_custom_call.1} parent=59 // pred_check
          %p354 = pneg %p138
        $region62: #{tpu_custom_call.1} parent=59 // pred_check_branch
          %356 = sbr.rel (%p354) target = $region64
        $region63: #{tpu_custom_call.1} parent=59 // pred_region
          %s357 = smul.u32 %s27, 2
          %s358 = sadd.s32 %s357, %s28
          %p359 = scmp.lt.s32.totalorder %s358, 3
          %s360 = scalar_select %p359, %s358, 3
          %s361 = smul.addr %s360, 4
          %s362 = scalar_lea.vmem %s3, %s361
        $region64: #{tpu_custom_call.1} parent=59 // pred_fallthru
          _
      $region60: #{tpu_custom_call.1} parent=5 // pred_fallthru
        _
    $region6: #{tpu_custom_call.1} parent=1 // loop_footer
      %s18 = sadd.s32 1, %s14
    $region7: #{tpu_custom_call.1} parent=1 // loop_footer_branch
      %13 = sbr.rel target = $region3
    $region8: #{tpu_custom_call.1} parent=1 // loop_exit
      _
    %363 = vsyncpa [#allocation4], 1
    %s364 = scalar_lea.sflag [#allocation4], 1
    %365 = vsyncpa %s364, 1
    %366 = vsyncpa [#allocation5], 1
    %s367 = scalar_lea.sflag [#allocation5], 1
    %368 = vsyncpa %s367, 1
    %369 = vsyncpa [#allocation6], 1
    %s370 = scalar_lea.sflag [#allocation6], 1
    %371 = vsyncpa %s370, 1

</llo_original>
